<compile_context>
chip_gen: v7x
topology: tpu7x:2x2x1
jax: 0.10.0
libtpu: 0.0.40
codegen_flags: <defaults>
</compile_context>

<pallas_src>
import functools

import jax
import jax.numpy as jnp
from jax.experimental import pallas as pl
from jax.experimental.pallas import tpu as pltpu


def cross_network_kernel(x0_ref, u_ref, vt_ref, b_ref, out_ref, *, num_layers):
    # x0_ref/out_ref: (D, TB); u_ref: (L, D, R); vt_ref: (L, R, D); b_ref: (L, D, 1)
    x0 = x0_ref[...].astype(jnp.float32)       # f32 accumulator / multiplier
    compute_dtype = vt_ref.dtype                # feed the MXU in native param dtype

    def layer_step(layer, xi):
        Vt = vt_ref[layer]                      # (R, D), native dtype
        U = u_ref[layer]                        # (D, R), native dtype
        b = b_ref[layer]                        # (D, 1)
        # xvT = V^T @ xiT -> (R, TB); f32 accumulation on the MXU.
        xv = jnp.dot(Vt, xi.astype(compute_dtype),
                     preferred_element_type=jnp.float32)
        # uvT = U @ xvT -> (D, TB); standard contraction, output lane-dense in TB.
        uv = jnp.dot(U, xv.astype(compute_dtype),
                     preferred_element_type=jnp.float32)
        # xiT = x0T * (uvT + b) + xiT  (bias fused into the VPU FMA chain)
        return x0 * (uv + b) + xi

    xi = x0
    if num_layers <= 8:
        # Short stacks: static unroll so the scheduler sees the whole chain.
        for layer in range(num_layers):
            xi = layer_step(layer, xi)
    else:
        # Deep stacks: bound live ranges / code size with a real loop and
        # dynamic layer indexing into the resident parameter blocks.
        xi = jax.lax.fori_loop(0, num_layers, layer_step, xi)

    out_ref[...] = xi.astype(out_ref.dtype)


def _default_tile_batch(batch, input_dim, itemsize=4):
    """Lane-dense batch tile: multiple of 128 that divides B, keeps each
    activation block <= ~2 MiB (safe for v5e's 16 MiB scoped VMEM with
    double-buffered in+out), and yields >= 2 grid tiles when possible so
    v7x's two TensorCores both get work."""
    if batch <= 128 or batch % 128 != 0:
        return batch
    max_rows = max(128, (2 * 1024 * 1024) // max(1, input_dim * itemsize))
    tb = 128
    for cand in range(128, batch // 2 + 1, 128):
        if batch % cand == 0 and cand <= max_rows:
            tb = cand
    return tb


def cross_network(x0, U, V, bias, *, tile_batch=None):
    """x0: (B, D); U, V: (L, D, R); bias: (L, D).  Returns (B, D)."""
    B, D = x0.shape
    L, _, R = U.shape

    tb = (_default_tile_batch(B, D, jnp.dtype(x0.dtype).itemsize)
          if tile_batch is None else tile_batch)
    assert B % tb == 0, "batch must be divisible by tile_batch (pad upstream)"

    # Feature-major layout + pre-transposed V + 2-D bias (once, outside pallas_call).
    x0_t = x0.T                                  # (D, B): batch on the lane axis
    Vt = jnp.transpose(V, (0, 2, 1))             # (L, R, D)
    b3 = bias[:, :, None]                        # (L, D, 1)

    kernel = functools.partial(cross_network_kernel, num_layers=L)
    out_t = pl.pallas_call(
        kernel,
        out_shape=jax.ShapeDtypeStruct((D, B), x0.dtype),
        grid_spec=pltpu.PrefetchScalarGridSpec(
            num_scalar_prefetch=0,
            grid=(B // tb,),
            in_specs=[
                # Streamed activation tile (lane axis = batch).  Deeper
                # buffering (pl.Buffered(3)) only if a profile shows exposed DMA.
                pl.BlockSpec((D, tb), lambda i: (0, i)),
                pl.BlockSpec((L, D, R), lambda i: (0, 0, 0)),   # U   (resident)
                pl.BlockSpec((L, R, D), lambda i: (0, 0, 0)),   # V^T (resident)
                pl.BlockSpec((L, D, 1), lambda i: (0, 0, 0)),   # bias (resident)
            ],
            out_specs=pl.BlockSpec((D, tb), lambda i: (0, i)),
        ),
        compiler_params=pltpu.CompilerParams(
            dimension_semantics=("parallel",),
        ),
    )(x0_t, U, Vt, b3)
    return out_t.T


def cross_network_ref(x0, U, V, bias):
    """Pure-JAX reference mirroring the PyTorch forward."""
    xi = x0.astype(jnp.float32)
    x0f = xi
    for layer in range(U.shape[0]):
        xv = xi @ V[layer]
        uv = xv @ U[layer].T + bias[layer]
        xi = x0f * uv + xi
    return xi.astype(x0.dtype)


if __name__ == "__main__":
    key = jax.random.PRNGKey(0)
    kx, ku, kv, kx2 = jax.random.split(key, 4)

    # Small shapes matching the module (rank=10 default).
    batch, input_dim, num_layers, rank = 8, 32, 3, 10
    x0 = jax.random.normal(kx, (batch, input_dim), dtype=jnp.float32)
    U = jax.random.normal(ku, (num_layers, input_dim, rank), dtype=jnp.float32) * 0.01
    V = jax.random.normal(kv, (num_layers, input_dim, rank), dtype=jnp.float32) * 0.01
    bias = jnp.zeros((num_layers, input_dim), dtype=jnp.float32)

    out = jax.block_until_ready(cross_network(x0, U, V, bias))
    ref = cross_network_ref(x0, U, V, bias)
    assert out.shape == (batch, input_dim)
    assert jnp.allclose(out, ref, atol=1e-5, rtol=1e-5), "mismatch vs reference"

    # Multi-tile path: exercises the lane-dense 128-wide batch tiling (2 grid steps).
    x0b = jax.random.normal(kx2, (256, input_dim), dtype=jnp.float32)
    outb = jax.block_until_ready(cross_network(x0b, U, V, bias))
    refb = cross_network_ref(x0b, U, V, bias)
    assert jnp.allclose(outb, refb, atol=1e-5, rtol=1e-5), "mismatch (tiled) vs reference"

    print("KERNEL_OK")
</pallas_src>

<mosaic_0001>
module attributes {stable_mosaic.version = 11 : i64} {
  func.func @cross_network_kernel(%arg0: i32, %arg1: memref<32x8xf32, #tpu.memory_space<vmem>>, %arg2: memref<3x32x10xf32, #tpu.memory_space<vmem>>, %arg3: memref<3x10x32xf32, #tpu.memory_space<vmem>>, %arg4: memref<3x32x1xf32, #tpu.memory_space<vmem>>, %arg5: memref<32x8xf32, #tpu.memory_space<vmem>>) attributes {dimension_semantics = [#tpu.dimension_semantics<parallel>], iteration_bounds = array<i64: 1>, scalar_prefetch = 0 : i64, scratch_operands = 0 : i64, tpu.core_type = #tpu.core_type<tc>, window_params = [{transform_indices = @transform_0, window_bounds = array<i64: 32, 8>}, {pipeline_mode = #tpu.pipeline_mode<synchronous>, transform_indices = @transform_1, window_bounds = array<i64: 3, 32, 10>}, {pipeline_mode = #tpu.pipeline_mode<synchronous>, transform_indices = @transform_2, window_bounds = array<i64: 3, 10, 32>}, {pipeline_mode = #tpu.pipeline_mode<synchronous>, transform_indices = @transform_3, window_bounds = array<i64: 3, 32, 1>}, {transform_indices = @transform_4, window_bounds = array<i64: 32, 8>}]} {
    %c0 = arith.constant 0 : index
    %c0_0 = arith.constant 0 : index
    %0 = vector.load %arg1[%c0, %c0_0] : memref<32x8xf32, #tpu.memory_space<vmem>>, vector<32x8xf32>
    %c0_1 = arith.constant 0 : index
    %c0_2 = arith.constant 0 : index
    %c0_3 = arith.constant 0 : index
    %1 = vector.load %arg3[%c0_1, %c0_2, %c0_3] : memref<3x10x32xf32, #tpu.memory_space<vmem>>, vector<1x10x32xf32>
    %2 = vector.shape_cast %1 : vector<1x10x32xf32> to vector<10x32xf32>
    %c0_4 = arith.constant 0 : index
    %c0_5 = arith.constant 0 : index
    %c0_6 = arith.constant 0 : index
    %3 = vector.load %arg2[%c0_4, %c0_5, %c0_6] : memref<3x32x10xf32, #tpu.memory_space<vmem>>, vector<1x32x10xf32>
    %4 = vector.shape_cast %3 : vector<1x32x10xf32> to vector<32x10xf32>
    %c0_7 = arith.constant 0 : index
    %c0_8 = arith.constant 0 : index
    %c0_9 = arith.constant 0 : index
    %5 = vector.load %arg4[%c0_7, %c0_8, %c0_9] : memref<3x32x1xf32, #tpu.memory_space<vmem>>, vector<1x32x1xf32>
    %6 = vector.shape_cast %5 : vector<1x32x1xf32> to vector<32x1xf32>
    %cst = arith.constant dense<0.000000e+00> : vector<10x8xf32>
    %7 = tpu.matmul %2, %0, %cst {dimension_numbers = #tpu.dot_dimension_numbers<[1], [0], [0], [1], [0, 0, 1, 1], [], []>} : vector<10x32xf32>, vector<32x8xf32>, vector<10x8xf32> -> vector<10x8xf32>
    %cst_10 = arith.constant dense<0.000000e+00> : vector<32x8xf32>
    %8 = tpu.matmul %4, %7, %cst_10 {dimension_numbers = #tpu.dot_dimension_numbers<[1], [0], [0], [1], [0, 0, 1, 1], [], []>} : vector<32x10xf32>, vector<10x8xf32>, vector<32x8xf32> -> vector<32x8xf32>
    %9 = vector.broadcast %6 : vector<32x1xf32> to vector<32x8xf32>
    %10 = arith.addf %8, %9 : vector<32x8xf32>
    %11 = arith.mulf %0, %10 : vector<32x8xf32>
    %12 = arith.addf %11, %0 : vector<32x8xf32>
    %c1 = arith.constant 1 : index
    %c0_11 = arith.constant 0 : index
    %c0_12 = arith.constant 0 : index
    %13 = vector.load %arg3[%c1, %c0_11, %c0_12] : memref<3x10x32xf32, #tpu.memory_space<vmem>>, vector<1x10x32xf32>
    %14 = vector.shape_cast %13 : vector<1x10x32xf32> to vector<10x32xf32>
    %c1_13 = arith.constant 1 : index
    %c0_14 = arith.constant 0 : index
    %c0_15 = arith.constant 0 : index
    %15 = vector.load %arg2[%c1_13, %c0_14, %c0_15] : memref<3x32x10xf32, #tpu.memory_space<vmem>>, vector<1x32x10xf32>
    %16 = vector.shape_cast %15 : vector<1x32x10xf32> to vector<32x10xf32>
    %c1_16 = arith.constant 1 : index
    %c0_17 = arith.constant 0 : index
    %c0_18 = arith.constant 0 : index
    %17 = vector.load %arg4[%c1_16, %c0_17, %c0_18] : memref<3x32x1xf32, #tpu.memory_space<vmem>>, vector<1x32x1xf32>
    %18 = vector.shape_cast %17 : vector<1x32x1xf32> to vector<32x1xf32>
    %cst_19 = arith.constant dense<0.000000e+00> : vector<10x8xf32>
    %19 = tpu.matmul %14, %12, %cst_19 {dimension_numbers = #tpu.dot_dimension_numbers<[1], [0], [0], [1], [0, 0, 1, 1], [], []>} : vector<10x32xf32>, vector<32x8xf32>, vector<10x8xf32> -> vector<10x8xf32>
    %cst_20 = arith.constant dense<0.000000e+00> : vector<32x8xf32>
    %20 = tpu.matmul %16, %19, %cst_20 {dimension_numbers = #tpu.dot_dimension_numbers<[1], [0], [0], [1], [0, 0, 1, 1], [], []>} : vector<32x10xf32>, vector<10x8xf32>, vector<32x8xf32> -> vector<32x8xf32>
    %21 = vector.broadcast %18 : vector<32x1xf32> to vector<32x8xf32>
    %22 = arith.addf %20, %21 : vector<32x8xf32>
    %23 = arith.mulf %0, %22 : vector<32x8xf32>
    %24 = arith.addf %23, %12 : vector<32x8xf32>
    %c2 = arith.constant 2 : index
    %c0_21 = arith.constant 0 : index
    %c0_22 = arith.constant 0 : index
    %25 = vector.load %arg3[%c2, %c0_21, %c0_22] : memref<3x10x32xf32, #tpu.memory_space<vmem>>, vector<1x10x32xf32>
    %26 = vector.shape_cast %25 : vector<1x10x32xf32> to vector<10x32xf32>
    %c2_23 = arith.constant 2 : index
    %c0_24 = arith.constant 0 : index
    %c0_25 = arith.constant 0 : index
    %27 = vector.load %arg2[%c2_23, %c0_24, %c0_25] : memref<3x32x10xf32, #tpu.memory_space<vmem>>, vector<1x32x10xf32>
    %28 = vector.shape_cast %27 : vector<1x32x10xf32> to vector<32x10xf32>
    %c2_26 = arith.constant 2 : index
    %c0_27 = arith.constant 0 : index
    %c0_28 = arith.constant 0 : index
    %29 = vector.load %arg4[%c2_26, %c0_27, %c0_28] : memref<3x32x1xf32, #tpu.memory_space<vmem>>, vector<1x32x1xf32>
    %30 = vector.shape_cast %29 : vector<1x32x1xf32> to vector<32x1xf32>
    %cst_29 = arith.constant dense<0.000000e+00> : vector<10x8xf32>
    %31 = tpu.matmul %26, %24, %cst_29 {dimension_numbers = #tpu.dot_dimension_numbers<[1], [0], [0], [1], [0, 0, 1, 1], [], []>} : vector<10x32xf32>, vector<32x8xf32>, vector<10x8xf32> -> vector<10x8xf32>
    %cst_30 = arith.constant dense<0.000000e+00> : vector<32x8xf32>
    %32 = tpu.matmul %28, %31, %cst_30 {dimension_numbers = #tpu.dot_dimension_numbers<[1], [0], [0], [1], [0, 0, 1, 1], [], []>} : vector<32x10xf32>, vector<10x8xf32>, vector<32x8xf32> -> vector<32x8xf32>
    %33 = vector.broadcast %30 : vector<32x1xf32> to vector<32x8xf32>
    %34 = arith.addf %32, %33 : vector<32x8xf32>
    %35 = arith.mulf %0, %34 : vector<32x8xf32>
    %36 = arith.addf %35, %24 : vector<32x8xf32>
    %c0_31 = arith.constant 0 : index
    %c0_32 = arith.constant 0 : index
    %37 = vector.load %arg5[%c0_31, %c0_32] : memref<32x8xf32, #tpu.memory_space<vmem>>, vector<32x8xf32>
    tpu.vector_store %arg5[%c0_31, %c0_32], %36 {strides = array<i32>} : memref<32x8xf32, #tpu.memory_space<vmem>>, vector<32x8xf32>,
    return
  }
  func.func @transform_0(%arg0: i32) -> (i32, i32) {
    %c0_i32 = arith.constant 0 : i32
    %c0_i32_0 = arith.constant 0 : i32
    return %c0_i32, %arg0 : i32, i32
  }
  func.func @transform_1(%arg0: i32) -> (i32, i32, i32) {
    %c0_i32 = arith.constant 0 : i32
    %c0_i32_0 = arith.constant 0 : i32
    %c0_i32_1 = arith.constant 0 : i32
    %c0_i32_2 = arith.constant 0 : i32
    return %c0_i32, %c0_i32_0, %c0_i32_1 : i32, i32, i32
  }
  func.func @transform_2(%arg0: i32) -> (i32, i32, i32) {
    %c0_i32 = arith.constant 0 : i32
    %c0_i32_0 = arith.constant 0 : i32
    %c0_i32_1 = arith.constant 0 : i32
    %c0_i32_2 = arith.constant 0 : i32
    return %c0_i32, %c0_i32_0, %c0_i32_1 : i32, i32, i32
  }
  func.func @transform_3(%arg0: i32) -> (i32, i32, i32) {
    %c0_i32 = arith.constant 0 : i32
    %c0_i32_0 = arith.constant 0 : i32
    %c0_i32_1 = arith.constant 0 : i32
    %c0_i32_2 = arith.constant 0 : i32
    return %c0_i32, %c0_i32_0, %c0_i32_1 : i32, i32, i32
  }
  func.func @transform_4(%arg0: i32) -> (i32, i32) {
    %c0_i32 = arith.constant 0 : i32
    %c0_i32_0 = arith.constant 0 : i32
    return %c0_i32, %arg0 : i32, i32
  }
}

</mosaic_0001>

<llo_original>
// kernel: tpu_custom_call.1
$region0: #{tpu_custom_call.1}
  #allocation0 [shape = 'u32[]', space=smem, size = 0x4, offset = 0x4, fixed_abs, tag = 'smem constant byte address 0x4 - core index']
  #allocation1 [shape = 'u32[144,128]{1,0:T(1,128)}', space=vmem, size = 0x12000, scoped, tag = 'internal scratch']
  %s0 = inlined_call_operand.vmem [shape: f32[32,8], index: 0, kind: input, shape index: {}]
  %s1 = inlined_call_operand.vmem [shape: f32[3,32,10], index: 1, kind: input, shape index: {}]
  %s2 = inlined_call_operand.vmem [shape: f32[3,10,32], index: 2, kind: input, shape index: {}]
  %s3 = inlined_call_operand.vmem [shape: f32[3,32,1], index: 3, kind: input, shape index: {}]
  %s4 = inlined_call_operand.vmem [shape: f32[32,8], index: 4, kind: output, shape index: {}]
  %s5 = sld [smem:[#allocation0]]
  $region26: #{tpu_custom_call.1} parent=0
    _
  %s7 = ssub.s32 1, %s5
  %s8 = scalar_select 0, %s7, %s5
  // Predicated region
  $region2: #{tpu_custom_call.1} parent=0 // pred_check
    _
  $region3: #{tpu_custom_call.1} parent=0 // pred_check_branch
    %10 = sbr.rel (0) target = $region5
  $region4: #{tpu_custom_call.1} parent=0 // pred_region
    _
  $region5: #{tpu_custom_call.1} parent=0 // pred_fallthru
    _
  // Predicated region
  $region6: #{tpu_custom_call.1} parent=0 // pred_check
    _
  $region7: #{tpu_custom_call.1} parent=0 // pred_check_branch
    %12 = sbr.rel (0) target = $region9
  $region8: #{tpu_custom_call.1} parent=0 // pred_region
    _
  $region9: #{tpu_custom_call.1} parent=0 // pred_fallthru
    _
  // Predicated region
  $region10: #{tpu_custom_call.1} parent=0 // pred_check
    _
  $region11: #{tpu_custom_call.1} parent=0 // pred_check_branch
    %14 = sbr.rel (0) target = $region13
  $region12: #{tpu_custom_call.1} parent=0 // pred_region
    _
  $region13: #{tpu_custom_call.1} parent=0 // pred_fallthru
    _
  // Predicated region
  $region14: #{tpu_custom_call.1} parent=0 // pred_check
    _
  $region15: #{tpu_custom_call.1} parent=0 // pred_check_branch
    %16 = sbr.rel (0) target = $region17
  $region16: #{tpu_custom_call.1} parent=0 // pred_region
    _
  $region17: #{tpu_custom_call.1} parent=0 // pred_fallthru
    _
  %v17 = vld [vmem:[%s0] sm:$0xff]
  %v18 = vld [vmem:[%s0 + $0x8] sm:$0xff]
  %v19 = vld [vmem:[%s0 + $0x10] sm:$0xff]
  %v20 = vld [vmem:[%s0 + $0x18] sm:$0xff]
  %v21 = vld [vmem:[%s2] sm:$0xff]
  %v22 = vld [vmem:[%s2 + $0x8] sm:$0x3]
  %v23 = vld [vmem:[%s1] sm:$0xff]
  %v24 = vld [vmem:[%s1 + $0x8] sm:$0xff]
  %v25 = vld [vmem:[%s1 + $0x10] sm:$0xff]
  %v26 = vld [vmem:[%s1 + $0x18] sm:$0xff]
  %v27 = vld [vmem:[%s3] sm:$0xff]
  %v28 = vld [vmem:[%s3 + $0x8] sm:$0xff]
  %v29 = vld [vmem:[%s3 + $0x10] sm:$0xff]
  %v30 = vld [vmem:[%s3 + $0x18] sm:$0xff]
  %vm31 = vcmask 261120
  %v33 = vsel %vm31, %v21, 0
  %v36 = vsel %vm31, %v22, 0
  %38 = vmatprep.subr.mxu0 0.0
  %39 = vmatpush1.msra.mxu0 %v17
  %40 = vmatprep.subr.mxu0 0.0
  %41 = vmatpush1.msra.mxu0 %v18
  %42 = vmatprep.subr.mxu0 0.0
  %43 = vmatpush1.msra.mxu0 %v19
  %44 = vmatprep.subr.mxu0 0.0
  %45 = vmatpush1.msra.mxu0 %v20
  %46 = vmatprep.subr.mxu0 0.0
  %47 = vmatpush1.msra.mxu0 0.0
  %48 = vmatprep.subr.mxu0 0.0
  %49 = vmatpush1.msra.mxu0 0.0
  %50 = vmatprep.subr.mxu0 0.0
  %51 = vmatpush1.msra.mxu0 0.0
  %52 = vmatprep.subr.mxu0 0.0
  %53 = vmatpush1.msra.mxu0 0.0
  %54 = vmatprep.subr.mxu0 0.0
  %55 = vmatpush1.msra.mxu0 0.0
  %56 = vmatprep.subr.mxu0 0.0
  %57 = vmatpush1.msra.mxu0 0.0
  %58 = vmatprep.subr.mxu0 0.0
  %59 = vmatpush1.msra.mxu0 0.0
  %60 = vmatprep.subr.mxu0 0.0
  %61 = vmatpush1.msra.mxu0 0.0
  %62 = vmatprep.subr.mxu0 0.0
  %63 = vmatpush1.msra.mxu0 0.0
  %64 = vmatprep.subr.mxu0 0.0
  %65 = vmatpush1.msra.mxu0 0.0
  %66 = vmatprep.subr.mxu0 0.0
  %67 = vmatpush1.msra.mxu0 0.0
  %68 = vmatprep.subr.mxu0 0.0
  %69 = vmatpush1.msra.mxu0 0.0
  %70 = vmatprep.subr.mxu0 0.0
  %71 = vmatpush1.msra.mxu0 0.0
  %72 = vmatprep.subr.mxu0 0.0
  %73 = vmatpush1.msra.mxu0 0.0
  %74 = vmatprep.subr.mxu0 0.0
  %75 = vmatpush1.msra.mxu0 0.0
  %76 = vmatprep.subr.mxu0 0.0
  %77 = vmatpush1.msra.mxu0 0.0
  %78 = vmatprep.subr.mxu0 0.0
  %79 = vmatpush1.msra.mxu0 0.0
  %80 = vmatprep.subr.mxu0 0.0
  %81 = vmatpush1.msra.mxu0 0.0
  %82 = vmatprep.subr.mxu0 0.0
  %83 = vmatpush1.msra.mxu0 0.0
  %84 = vmatprep.subr.mxu0 0.0
  %85 = vmatpush1.msra.mxu0 0.0
  %86 = vmatprep.subr.mxu0 0.0
  %87 = vmatpush1.msra.mxu0 0.0
  %88 = vmatprep.subr.mxu0 0.0
  %89 = vmatpush1.msra.mxu0 0.0
  %90 = vmatprep.subr.mxu0 0.0
  %91 = vmatpush1.msra.mxu0 0.0
  %92 = vmatprep.subr.mxu0 0.0
  %93 = vmatpush1.msra.mxu0 0.0
  %94 = vmatprep.subr.mxu0 0.0
  %95 = vmatpush1.msra.mxu0 0.0
  %96 = vmatprep.subr.mxu0 0.0
  %97 = vmatpush1.msra.mxu0 0.0
  %98 = vmatprep.subr.mxu0 0.0
  %99 = vmatpush1.msra.mxu0 0.0
  %100 = vmatprep.subr.mxu0 0.0
  %101 = vmatpush1.msra.mxu0 0.0
  %102 = vmatprep.mubr.f32.mxu0 0.0
  %103 = vmatmul.mubr.f32.gmra.mrb[0].mxu0 %v33
  %v104 = vpop.f32.mrb[0].mxu0
  %v105 = vadd.f32 0.0, %v104
  %v106 = vpop.f32.mrb[0].mxu0
  %107 = vmatprep.mubr.f32.mxu0 0.0
  %108 = vmatmul.mubr.f32.gmra.mrb[0].mxu0 %v36
  %v109 = vpop.f32.mrb[0].mxu0
  %v110 = vadd.f32 0.0, %v109
  %v111 = vpop.f32.mrb[0].mxu0
  %112 = vdwg.mxu0
  %114 = vset.pattern.permute.xlu0 0
  %115 = vperm.xlu0 %114, %v27
  %v116 = vpop.permute.xlu0 %115
  %119 = vset.pattern.permute.xlu0 0
  %120 = vperm.xlu0 %119, %v28
  %v121 = vpop.permute.xlu0 %120
  %124 = vset.pattern.permute.xlu0 0
  %125 = vperm.xlu0 %124, %v29
  %v126 = vpop.permute.xlu0 %125
  %129 = vset.pattern.permute.xlu0 0
  %130 = vperm.xlu0 %129, %v30
  %v131 = vpop.permute.xlu0 %130
  %vm133 = vcmask 80896
  %v135 = vsel %vm133, %v23, 0
  %v138 = vsel %vm133, %v24, 0
  %v141 = vsel %vm133, %v25, 0
  %v144 = vsel %vm133, %v26, 0
  %vm146 = vcmask 1041408
  %v148 = vsel %vm146, %v110, 0
  %150 = vmatprep.subr.mxu0 0.0
  %151 = vmatpush1.msra.mxu0 %v105
  %152 = vmatprep.subr.mxu0 0.0
  %153 = vmatpush1.msra.mxu0 %v148
  %154 = vmatprep.subr.mxu0 0.0
  %155 = vmatpush1.msra.mxu0 0.0
  %156 = vmatprep.subr.mxu0 0.0
  %157 = vmatpush1.msra.mxu0 0.0
  %158 = vmatprep.subr.mxu0 0.0
  %159 = vmatpush1.msra.mxu0 0.0
  %160 = vmatprep.subr.mxu0 0.0
  %161 = vmatpush1.msra.mxu0 0.0
  %162 = vmatprep.subr.mxu0 0.0
  %163 = vmatpush1.msra.mxu0 0.0
  %164 = vmatprep.subr.mxu0 0.0
  %165 = vmatpush1.msra.mxu0 0.0
  %166 = vmatprep.subr.mxu0 0.0
  %167 = vmatpush1.msra.mxu0 0.0
  %168 = vmatprep.subr.mxu0 0.0
  %169 = vmatpush1.msra.mxu0 0.0
  %170 = vmatprep.subr.mxu0 0.0
  %171 = vmatpush1.msra.mxu0 0.0
  %172 = vmatprep.subr.mxu0 0.0
  %173 = vmatpush1.msra.mxu0 0.0
  %174 = vmatprep.subr.mxu0 0.0
  %175 = vmatpush1.msra.mxu0 0.0
  %176 = vmatprep.subr.mxu0 0.0
  %177 = vmatpush1.msra.mxu0 0.0
  %178 = vmatprep.subr.mxu0 0.0
  %179 = vmatpush1.msra.mxu0 0.0
  %180 = vmatprep.subr.mxu0 0.0
  %181 = vmatpush1.msra.mxu0 0.0
  %182 = vmatprep.subr.mxu0 0.0
  %183 = vmatpush1.msra.mxu0 0.0
  %184 = vmatprep.subr.mxu0 0.0
  %185 = vmatpush1.msra.mxu0 0.0
  %186 = vmatprep.subr.mxu0 0.0
  %187 = vmatpush1.msra.mxu0 0.0
  %188 = vmatprep.subr.mxu0 0.0
  %189 = vmatpush1.msra.mxu0 0.0
  %190 = vmatprep.subr.mxu0 0.0
  %191 = vmatpush1.msra.mxu0 0.0
  %192 = vmatprep.subr.mxu0 0.0
  %193 = vmatpush1.msra.mxu0 0.0
  %194 = vmatprep.subr.mxu0 0.0
  %195 = vmatpush1.msra.mxu0 0.0
  %196 = vmatprep.subr.mxu0 0.0
  %197 = vmatpush1.msra.mxu0 0.0
  %198 = vmatprep.subr.mxu0 0.0
  %199 = vmatpush1.msra.mxu0 0.0
  %200 = vmatprep.subr.mxu0 0.0
  %201 = vmatpush1.msra.mxu0 0.0
  %202 = vmatprep.subr.mxu0 0.0
  %203 = vmatpush1.msra.mxu0 0.0
  %204 = vmatprep.subr.mxu0 0.0
  %205 = vmatpush1.msra.mxu0 0.0
  %206 = vmatprep.subr.mxu0 0.0
  %207 = vmatpush1.msra.mxu0 0.0
  %208 = vmatprep.subr.mxu0 0.0
  %209 = vmatpush1.msra.mxu0 0.0
  %210 = vmatprep.subr.mxu0 0.0
  %211 = vmatpush1.msra.mxu0 0.0
  %212 = vmatprep.subr.mxu0 0.0
  %213 = vmatpush1.msra.mxu0 0.0
  %214 = vmatprep.mubr.f32.mxu0 0.0
  %215 = vmatmul.mubr.f32.gmra.mrb[0].mxu0 %v135
  %v216 = vpop.f32.mrb[0].mxu0
  %v217 = vadd.f32 %v116, %v216
  %v218 = vpop.f32.mrb[0].mxu0
  %219 = vmatprep.mubr.f32.mxu0 0.0
  %220 = vmatmul.mubr.f32.gmra.mrb[0].mxu0 %v138
  %v221 = vpop.f32.mrb[0].mxu0
  %v222 = vadd.f32 %v121, %v221
  %v223 = vpop.f32.mrb[0].mxu0
  %224 = vmatprep.mubr.f32.mxu0 0.0
  %225 = vmatmul.mubr.f32.gmra.mrb[0].mxu0 %v141
  %v226 = vpop.f32.mrb[0].mxu0
  %v227 = vadd.f32 %v126, %v226
  %v228 = vpop.f32.mrb[0].mxu0
  %229 = vmatprep.mubr.f32.mxu0 0.0
  %230 = vmatmul.mubr.f32.gmra.mrb[0].mxu0 %v144
  %v231 = vpop.f32.mrb[0].mxu0
  %v232 = vadd.f32 %v131, %v231
  %v233 = vpop.f32.mrb[0].mxu0
  %234 = vdwg.mxu0
  %v235 = vmul.f32 %v17, %v217
  %v236 = vmul.f32 %v18, %v222
  %v237 = vmul.f32 %v19, %v227
  %v238 = vmul.f32 %v20, %v232
  %v239 = vadd.f32 %v235, %v17
  %v240 = vadd.f32 %v236, %v18
  %v241 = vadd.f32 %v237, %v19
  %v242 = vadd.f32 %v238, %v20
  %s243 = scalar_lea.vmem %s2, 16
  %v244 = vld [vmem:[%s243] sm:$0xff]
  %v245 = vld [vmem:[%s243 + $0x8] sm:$0x3]
  %s246 = scalar_lea.vmem %s1, 32
  %v247 = vld [vmem:[%s246] sm:$0xff]
  %v248 = vld [vmem:[%s246 + $0x8] sm:$0xff]
  %v249 = vld [vmem:[%s246 + $0x10] sm:$0xff]
  %v250 = vld [vmem:[%s246 + $0x18] sm:$0xff]
  %s251 = scalar_lea.vmem %s3, 32
  %v252 = vld [vmem:[%s251] sm:$0xff]
  %v253 = vld [vmem:[%s251 + $0x8] sm:$0xff]
  %v254 = vld [vmem:[%s251 + $0x10] sm:$0xff]
  %v255 = vld [vmem:[%s251 + $0x18] sm:$0xff]
  %v257 = vsel %vm31, %v244, 0
  %v260 = vsel %vm31, %v245, 0
  %262 = vmatprep.subr.mxu0 0.0
  %263 = vmatpush1.msra.mxu0 %v239
  %264 = vmatprep.subr.mxu0 0.0
  %265 = vmatpush1.msra.mxu0 %v240
  %266 = vmatprep.subr.mxu0 0.0
  %267 = vmatpush1.msra.mxu0 %v241
  %268 = vmatprep.subr.mxu0 0.0
  %269 = vmatpush1.msra.mxu0 %v242
  %270 = vmatprep.subr.mxu0 0.0
  %271 = vmatpush1.msra.mxu0 0.0
  %272 = vmatprep.subr.mxu0 0.0
  %273 = vmatpush1.msra.mxu0 0.0
  %274 = vmatprep.subr.mxu0 0.0
  %275 = vmatpush1.msra.mxu0 0.0
  %276 = vmatprep.subr.mxu0 0.0
  %277 = vmatpush1.msra.mxu0 0.0
  %278 = vmatprep.subr.mxu0 0.0
  %279 = vmatpush1.msra.mxu0 0.0
  %280 = vmatprep.subr.mxu0 0.0
  %281 = vmatpush1.msra.mxu0 0.0
  %282 = vmatprep.subr.mxu0 0.0
  %283 = vmatpush1.msra.mxu0 0.0
  %284 = vmatprep.subr.mxu0 0.0
  %285 = vmatpush1.msra.mxu0 0.0
  %286 = vmatprep.subr.mxu0 0.0
  %287 = vmatpush1.msra.mxu0 0.0
  %288 = vmatprep.subr.mxu0 0.0
  %289 = vmatpush1.msra.mxu0 0.0
  %290 = vmatprep.subr.mxu0 0.0
  %291 = vmatpush1.msra.mxu0 0.0
  %292 = vmatprep.subr.mxu0 0.0
  %293 = vmatpush1.msra.mxu0 0.0
  %294 = vmatprep.subr.mxu0 0.0
  %295 = vmatpush1.msra.mxu0 0.0
  %296 = vmatprep.subr.mxu0 0.0
  %297 = vmatpush1.msra.mxu0 0.0
  %298 = vmatprep.subr.mxu0 0.0
  %299 = vmatpush1.msra.mxu0 0.0
  %300 = vmatprep.subr.mxu0 0.0
  %301 = vmatpush1.msra.mxu0 0.0
  %302 = vmatprep.subr.mxu0 0.0
  %303 = vmatpush1.msra.mxu0 0.0
  %304 = vmatprep.subr.mxu0 0.0
  %305 = vmatpush1.msra.mxu0 0.0
  %306 = vmatprep.subr.mxu0 0.0
  %307 = vmatpush1.msra.mxu0 0.0
  %308 = vmatprep.subr.mxu0 0.0
  %309 = vmatpush1.msra.mxu0 0.0
  %310 = vmatprep.subr.mxu0 0.0
  %311 = vmatpush1.msra.mxu0 0.0
  %312 = vmatprep.subr.mxu0 0.0
  %313 = vmatpush1.msra.mxu0 0.0
  %314 = vmatprep.subr.mxu0 0.0
  %315 = vmatpush1.msra.mxu0 0.0
  %316 = vmatprep.subr.mxu0 0.0
  %317 = vmatpush1.msra.mxu0 0.0
  %318 = vmatprep.subr.mxu0 0.0
  %319 = vmatpush1.msra.mxu0 0.0
  %320 = vmatprep.subr.mxu0 0.0
  %321 = vmatpush1.msra.mxu0 0.0
  %322 = vmatprep.subr.mxu0 0.0
  %323 = vmatpush1.msra.mxu0 0.0
  %324 = vmatprep.subr.mxu0 0.0
  %325 = vmatpush1.msra.mxu0 0.0
  %326 = vmatprep.mubr.f32.mxu0 0.0
  %327 = vmatmul.mubr.f32.gmra.mrb[0].mxu0 %v257
  %v328 = vpop.f32.mrb[0].mxu0
  %v329 = vadd.f32 0.0, %v328
  %v330 = vpop.f32.mrb[0].mxu0
  %331 = vmatprep.mubr.f32.mxu0 0.0
  %332 = vmatmul.mubr.f32.gmra.mrb[0].mxu0 %v260
  %v333 = vpop.f32.mrb[0].mxu0
  %v334 = vadd.f32 0.0, %v333
  %v335 = vpop.f32.mrb[0].mxu0
  %336 = vdwg.mxu0
  %338 = vset.pattern.permute.xlu0 0
  %339 = vperm.xlu0 %338, %v252
  %v340 = vpop.permute.xlu0 %339
  %343 = vset.pattern.permute.xlu0 0
  %344 = vperm.xlu0 %343, %v253
  %v345 = vpop.permute.xlu0 %344
  %348 = vset.pattern.permute.xlu0 0
  %349 = vperm.xlu0 %348, %v254
  %v350 = vpop.permute.xlu0 %349
  %353 = vset.pattern.permute.xlu0 0
  %354 = vperm.xlu0 %353, %v255
  %v355 = vpop.permute.xlu0 %354
  %v358 = vsel %vm133, %v247, 0
  %v361 = vsel %vm133, %v248, 0
  %v364 = vsel %vm133, %v249, 0
  %v367 = vsel %vm133, %v250, 0
  %v370 = vsel %vm146, %v334, 0
  %372 = vmatprep.subr.mxu0 0.0
  %373 = vmatpush1.msra.mxu0 %v329
  %374 = vmatprep.subr.mxu0 0.0
  %375 = vmatpush1.msra.mxu0 %v370
  %376 = vmatprep.subr.mxu0 0.0
  %377 = vmatpush1.msra.mxu0 0.0
  %378 = vmatprep.subr.mxu0 0.0
  %379 = vmatpush1.msra.mxu0 0.0
  %380 = vmatprep.subr.mxu0 0.0
  %381 = vmatpush1.msra.mxu0 0.0
  %382 = vmatprep.subr.mxu0 0.0
  %383 = vmatpush1.msra.mxu0 0.0
  %384 = vmatprep.subr.mxu0 0.0
  %385 = vmatpush1.msra.mxu0 0.0
  %386 = vmatprep.subr.mxu0 0.0
  %387 = vmatpush1.msra.mxu0 0.0
  %388 = vmatprep.subr.mxu0 0.0
  %389 = vmatpush1.msra.mxu0 0.0
  %390 = vmatprep.subr.mxu0 0.0
  %391 = vmatpush1.msra.mxu0 0.0
  %392 = vmatprep.subr.mxu0 0.0
  %393 = vmatpush1.msra.mxu0 0.0
  %394 = vmatprep.subr.mxu0 0.0
  %395 = vmatpush1.msra.mxu0 0.0
  %396 = vmatprep.subr.mxu0 0.0
  %397 = vmatpush1.msra.mxu0 0.0
  %398 = vmatprep.subr.mxu0 0.0
  %399 = vmatpush1.msra.mxu0 0.0
  %400 = vmatprep.subr.mxu0 0.0
  %401 = vmatpush1.msra.mxu0 0.0
  %402 = vmatprep.subr.mxu0 0.0
  %403 = vmatpush1.msra.mxu0 0.0
  %404 = vmatprep.subr.mxu0 0.0
  %405 = vmatpush1.msra.mxu0 0.0
  %406 = vmatprep.subr.mxu0 0.0
  %407 = vmatpush1.msra.mxu0 0.0
  %408 = vmatprep.subr.mxu0 0.0
  %409 = vmatpush1.msra.mxu0 0.0
  %410 = vmatprep.subr.mxu0 0.0
  %411 = vmatpush1.msra.mxu0 0.0
  %412 = vmatprep.subr.mxu0 0.0
  %413 = vmatpush1.msra.mxu0 0.0
  %414 = vmatprep.subr.mxu0 0.0
  %415 = vmatpush1.msra.mxu0 0.0
  %416 = vmatprep.subr.mxu0 0.0
  %417 = vmatpush1.msra.mxu0 0.0
  %418 = vmatprep.subr.mxu0 0.0
  %419 = vmatpush1.msra.mxu0 0.0
  %420 = vmatprep.subr.mxu0 0.0
  %421 = vmatpush1.msra.mxu0 0.0
  %422 = vmatprep.subr.mxu0 0.0
  %423 = vmatpush1.msra.mxu0 0.0
  %424 = vmatprep.subr.mxu0 0.0
  %425 = vmatpush1.msra.mxu0 0.0
  %426 = vmatprep.subr.mxu0 0.0
  %427 = vmatpush1.msra.mxu0 0.0
  %428 = vmatprep.subr.mxu0 0.0
  %429 = vmatpush1.msra.mxu0 0.0
  %430 = vmatprep.subr.mxu0 0.0
  %431 = vmatpush1.msra.mxu0 0.0
  %432 = vmatprep.subr.mxu0 0.0
  %433 = vmatpush1.msra.mxu0 0.0
  %434 = vmatprep.subr.mxu0 0.0
  %435 = vmatpush1.msra.mxu0 0.0
  %436 = vmatprep.mubr.f32.mxu0 0.0
  %437 = vmatmul.mubr.f32.gmra.mrb[0].mxu0 %v358
  %v438 = vpop.f32.mrb[0].mxu0
  %v439 = vadd.f32 %v340, %v438
  %v440 = vpop.f32.mrb[0].mxu0
  %441 = vmatprep.mubr.f32.mxu0 0.0
  %442 = vmatmul.mubr.f32.gmra.mrb[0].mxu0 %v361
  %v443 = vpop.f32.mrb[0].mxu0
  %v444 = vadd.f32 %v345, %v443
  %v445 = vpop.f32.mrb[0].mxu0
  %446 = vmatprep.mubr.f32.mxu0 0.0
  %447 = vmatmul.mubr.f32.gmra.mrb[0].mxu0 %v364
  %v448 = vpop.f32.mrb[0].mxu0
  %v449 = vadd.f32 %v350, %v448
  %v450 = vpop.f32.mrb[0].mxu0
  %451 = vmatprep.mubr.f32.mxu0 0.0
  %452 = vmatmul.mubr.f32.gmra.mrb[0].mxu0 %v367
  %v453 = vpop.f32.mrb[0].mxu0
  %v454 = vadd.f32 %v355, %v453
  %v455 = vpop.f32.mrb[0].mxu0
  %456 = vdwg.mxu0
  %v457 = vmul.f32 %v17, %v439
  %v458 = vmul.f32 %v18, %v444
  %v459 = vmul.f32 %v19, %v449
  %v460 = vmul.f32 %v20, %v454
  %v461 = vadd.f32 %v457, %v239
  %v462 = vadd.f32 %v458, %v240
  %v463 = vadd.f32 %v459, %v241
  %v464 = vadd.f32 %v460, %v242
  %s465 = scalar_lea.vmem %s2, 32
  %v466 = vld [vmem:[%s465] sm:$0xff]
  %v467 = vld [vmem:[%s465 + $0x8] sm:$0x3]
  %s468 = scalar_lea.vmem %s1, 64
  %v469 = vld [vmem:[%s468] sm:$0xff]
  %v470 = vld [vmem:[%s468 + $0x8] sm:$0xff]
  %v471 = vld [vmem:[%s468 + $0x10] sm:$0xff]
  %v472 = vld [vmem:[%s468 + $0x18] sm:$0xff]
  %s473 = scalar_lea.vmem %s3, 64
  %v474 = vld [vmem:[%s473] sm:$0xff]
  %v475 = vld [vmem:[%s473 + $0x8] sm:$0xff]
  %v476 = vld [vmem:[%s473 + $0x10] sm:$0xff]
  %v477 = vld [vmem:[%s473 + $0x18] sm:$0xff]
  %v479 = vsel %vm31, %v466, 0
  %v482 = vsel %vm31, %v467, 0
  %484 = vmatprep.subr.mxu0 0.0
  %485 = vmatpush1.msra.mxu0 %v461
  %486 = vmatprep.subr.mxu0 0.0
  %487 = vmatpush1.msra.mxu0 %v462
  %488 = vmatprep.subr.mxu0 0.0
  %489 = vmatpush1.msra.mxu0 %v463
  %490 = vmatprep.subr.mxu0 0.0
  %491 = vmatpush1.msra.mxu0 %v464
  %492 = vmatprep.subr.mxu0 0.0
  %493 = vmatpush1.msra.mxu0 0.0
  %494 = vmatprep.subr.mxu0 0.0
  %495 = vmatpush1.msra.mxu0 0.0
  %496 = vmatprep.subr.mxu0 0.0
  %497 = vmatpush1.msra.mxu0 0.0
  %498 = vmatprep.subr.mxu0 0.0
  %499 = vmatpush1.msra.mxu0 0.0
  %500 = vmatprep.subr.mxu0 0.0
  %501 = vmatpush1.msra.mxu0 0.0
  %502 = vmatprep.subr.mxu0 0.0
  %503 = vmatpush1.msra.mxu0 0.0
  %504 = vmatprep.subr.mxu0 0.0
  %505 = vmatpush1.msra.mxu0 0.0
  %506 = vmatprep.subr.mxu0 0.0
  %507 = vmatpush1.msra.mxu0 0.0
  %508 = vmatprep.subr.mxu0 0.0
  %509 = vmatpush1.msra.mxu0 0.0
  %510 = vmatprep.subr.mxu0 0.0
  %511 = vmatpush1.msra.mxu0 0.0
  %512 = vmatprep.subr.mxu0 0.0
  %513 = vmatpush1.msra.mxu0 0.0
  %514 = vmatprep.subr.mxu0 0.0
  %515 = vmatpush1.msra.mxu0 0.0
  %516 = vmatprep.subr.mxu0 0.0
  %517 = vmatpush1.msra.mxu0 0.0
  %518 = vmatprep.subr.mxu0 0.0
  %519 = vmatpush1.msra.mxu0 0.0
  %520 = vmatprep.subr.mxu0 0.0
  %521 = vmatpush1.msra.mxu0 0.0
  %522 = vmatprep.subr.mxu0 0.0
  %523 = vmatpush1.msra.mxu0 0.0
  %524 = vmatprep.subr.mxu0 0.0
  %525 = vmatpush1.msra.mxu0 0.0
  %526 = vmatprep.subr.mxu0 0.0
  %527 = vmatpush1.msra.mxu0 0.0
  %528 = vmatprep.subr.mxu0 0.0
  %529 = vmatpush1.msra.mxu0 0.0
  %530 = vmatprep.subr.mxu0 0.0
  %531 = vmatpush1.msra.mxu0 0.0
  %532 = vmatprep.subr.mxu0 0.0
  %533 = vmatpush1.msra.mxu0 0.0
  %534 = vmatprep.subr.mxu0 0.0
  %535 = vmatpush1.msra.mxu0 0.0
  %536 = vmatprep.subr.mxu0 0.0
  %537 = vmatpush1.msra.mxu0 0.0
  %538 = vmatprep.subr.mxu0 0.0
  %539 = vmatpush1.msra.mxu0 0.0
  %540 = vmatprep.subr.mxu0 0.0
  %541 = vmatpush1.msra.mxu0 0.0
  %542 = vmatprep.subr.mxu0 0.0
  %543 = vmatpush1.msra.mxu0 0.0
  %544 = vmatprep.subr.mxu0 0.0
  %545 = vmatpush1.msra.mxu0 0.0
  %546 = vmatprep.subr.mxu0 0.0
  %547 = vmatpush1.msra.mxu0 0.0
  %548 = vmatprep.mubr.f32.mxu0 0.0
  %549 = vmatmul.mubr.f32.gmra.mrb[0].mxu0 %v479
  %v550 = vpop.f32.mrb[0].mxu0
  %v551 = vadd.f32 0.0, %v550
  %v552 = vpop.f32.mrb[0].mxu0
  %553 = vmatprep.mubr.f32.mxu0 0.0
  %554 = vmatmul.mubr.f32.gmra.mrb[0].mxu0 %v482
  %v555 = vpop.f32.mrb[0].mxu0
  %v556 = vadd.f32 0.0, %v555
  %v557 = vpop.f32.mrb[0].mxu0
  %558 = vdwg.mxu0
  %560 = vset.pattern.permute.xlu0 0
  %561 = vperm.xlu0 %560, %v474
  %v562 = vpop.permute.xlu0 %561
  %565 = vset.pattern.permute.xlu0 0
  %566 = vperm.xlu0 %565, %v475
  %v567 = vpop.permute.xlu0 %566
  %570 = vset.pattern.permute.xlu0 0
  %571 = vperm.xlu0 %570, %v476
  %v572 = vpop.permute.xlu0 %571
  %575 = vset.pattern.permute.xlu0 0
  %576 = vperm.xlu0 %575, %v477
  %v577 = vpop.permute.xlu0 %576
  %v580 = vsel %vm133, %v469, 0
  %v583 = vsel %vm133, %v470, 0
  %v586 = vsel %vm133, %v471, 0
  %v589 = vsel %vm133, %v472, 0
  %v592 = vsel %vm146, %v556, 0
  %594 = vmatprep.subr.mxu0 0.0
  %595 = vmatpush1.msra.mxu0 %v551
  %596 = vmatprep.subr.mxu0 0.0
  %597 = vmatpush1.msra.mxu0 %v592
  %598 = vmatprep.subr.mxu0 0.0
  %599 = vmatpush1.msra.mxu0 0.0
  %600 = vmatprep.subr.mxu0 0.0
  %601 = vmatpush1.msra.mxu0 0.0
  %602 = vmatprep.subr.mxu0 0.0
  %603 = vmatpush1.msra.mxu0 0.0
  %604 = vmatprep.subr.mxu0 0.0
  %605 = vmatpush1.msra.mxu0 0.0
  %606 = vmatprep.subr.mxu0 0.0
  %607 = vmatpush1.msra.mxu0 0.0
  %608 = vmatprep.subr.mxu0 0.0
  %609 = vmatpush1.msra.mxu0 0.0
  %610 = vmatprep.subr.mxu0 0.0
  %611 = vmatpush1.msra.mxu0 0.0
  %612 = vmatprep.subr.mxu0 0.0
  %613 = vmatpush1.msra.mxu0 0.0
  %614 = vmatprep.subr.mxu0 0.0
  %615 = vmatpush1.msra.mxu0 0.0
  %616 = vmatprep.subr.mxu0 0.0
  %617 = vmatpush1.msra.mxu0 0.0
  %618 = vmatprep.subr.mxu0 0.0
  %619 = vmatpush1.msra.mxu0 0.0
  %620 = vmatprep.subr.mxu0 0.0
  %621 = vmatpush1.msra.mxu0 0.0
  %622 = vmatprep.subr.mxu0 0.0
  %623 = vmatpush1.msra.mxu0 0.0
  %624 = vmatprep.subr.mxu0 0.0
  %625 = vmatpush1.msra.mxu0 0.0
  %626 = vmatprep.subr.mxu0 0.0
  %627 = vmatpush1.msra.mxu0 0.0
  %628 = vmatprep.subr.mxu0 0.0
  %629 = vmatpush1.msra.mxu0 0.0
  %630 = vmatprep.subr.mxu0 0.0
  %631 = vmatpush1.msra.mxu0 0.0
  %632 = vmatprep.subr.mxu0 0.0
  %633 = vmatpush1.msra.mxu0 0.0
  %634 = vmatprep.subr.mxu0 0.0
  %635 = vmatpush1.msra.mxu0 0.0
  %636 = vmatprep.subr.mxu0 0.0
  %637 = vmatpush1.msra.mxu0 0.0
  %638 = vmatprep.subr.mxu0 0.0
  %639 = vmatpush1.msra.mxu0 0.0
  %640 = vmatprep.subr.mxu0 0.0
  %641 = vmatpush1.msra.mxu0 0.0
  %642 = vmatprep.subr.mxu0 0.0
  %643 = vmatpush1.msra.mxu0 0.0
  %644 = vmatprep.subr.mxu0 0.0
  %645 = vmatpush1.msra.mxu0 0.0
  %646 = vmatprep.subr.mxu0 0.0
  %647 = vmatpush1.msra.mxu0 0.0
  %648 = vmatprep.subr.mxu0 0.0
  %649 = vmatpush1.msra.mxu0 0.0
  %650 = vmatprep.subr.mxu0 0.0
  %651 = vmatpush1.msra.mxu0 0.0
  %652 = vmatprep.subr.mxu0 0.0
  %653 = vmatpush1.msra.mxu0 0.0
  %654 = vmatprep.subr.mxu0 0.0
  %655 = vmatpush1.msra.mxu0 0.0
  %656 = vmatprep.subr.mxu0 0.0
  %657 = vmatpush1.msra.mxu0 0.0
  %658 = vmatprep.mubr.f32.mxu0 0.0
  %659 = vmatmul.mubr.f32.gmra.mrb[0].mxu0 %v580
  %v660 = vpop.f32.mrb[0].mxu0
  %v661 = vadd.f32 %v562, %v660
  %v662 = vpop.f32.mrb[0].mxu0
  %663 = vmatprep.mubr.f32.mxu0 0.0
  %664 = vmatmul.mubr.f32.gmra.mrb[0].mxu0 %v583
  %v665 = vpop.f32.mrb[0].mxu0
  %v666 = vadd.f32 %v567, %v665
  %v667 = vpop.f32.mrb[0].mxu0
  %668 = vmatprep.mubr.f32.mxu0 0.0
  %669 = vmatmul.mubr.f32.gmra.mrb[0].mxu0 %v586
  %v670 = vpop.f32.mrb[0].mxu0
  %v671 = vadd.f32 %v572, %v670
  %v672 = vpop.f32.mrb[0].mxu0
  %673 = vmatprep.mubr.f32.mxu0 0.0
  %674 = vmatmul.mubr.f32.gmra.mrb[0].mxu0 %v589
  %v675 = vpop.f32.mrb[0].mxu0
  %v676 = vadd.f32 %v577, %v675
  %v677 = vpop.f32.mrb[0].mxu0
  %678 = vdwg.mxu0
  %v679 = vmul.f32 %v17, %v661
  %v680 = vmul.f32 %v18, %v666
  %v681 = vmul.f32 %v19, %v671
  %v682 = vmul.f32 %v20, %v676
  %v683 = vadd.f32 %v679, %v461
  %v684 = vadd.f32 %v680, %v462
  %v685 = vadd.f32 %v681, %v463
  %v686 = vadd.f32 %v682, %v464
  %vm687 = vcmask 64512
  %688 = vst.msk [vmem:[%s4] sm:$0xff] %vm687, %v683
  %689 = vst.msk [vmem:[%s4 + $0x8] sm:$0xff] %vm687, %v684
  %690 = vst.msk [vmem:[%s4 + $0x10] sm:$0xff] %vm687, %v685
  %691 = vst.msk [vmem:[%s4 + $0x18] sm:$0xff] %vm687, %v686
  // Predicated region
  $region18: #{tpu_custom_call.1} parent=0 // pred_check
    _
  $region19: #{tpu_custom_call.1} parent=0 // pred_check_branch
    %693 = sbr.rel (0) target = $region21
  $region20: #{tpu_custom_call.1} parent=0 // pred_region
    _
  $region21: #{tpu_custom_call.1} parent=0 // pred_fallthru
    _
  // Predicated region
  $region22: #{tpu_custom_call.1} parent=0 // pred_check
    _
  $region23: #{tpu_custom_call.1} parent=0 // pred_check_branch
    %695 = sbr.rel (0) target = $region25
  $region24: #{tpu_custom_call.1} parent=0 // pred_region
    _
  $region25: #{tpu_custom_call.1} parent=0 // pred_fallthru
    _

</llo_original>
